<compile_context>
chip_gen: v6e
topology: v6e:2x2x1
jax: 0.10.0
libtpu: 0.0.40
codegen_flags: <defaults>
</compile_context>

<pallas_src>
import functools

import jax
import jax.numpy as jnp
from jax.experimental import pallas as pl
from jax.experimental.pallas import tpu as pltpu

NEG_INF = -1e30  # exp-mask value (matches the usual to_exp_mask large-negative)


def _attention_kernel(seq_ref,      # VMEM (BB, T, D_in) f32
                      hid_ref,      # VMEM (BB, H)       f32
                      lens_ref,     # VMEM (BB, 1)       int32
                      wseq_ref,     # VMEM (D_in, A)     f32  (shared across grid)
                      whid_ref,     # VMEM (H, A)        f32  (shared across grid)
                      v_ref,        # VMEM (1, A)        f32  (shared across grid)
                      ctx_ref,      # VMEM (BB, D_in)    f32
                      logits_ref):  # VMEM (BB, T)       f32  (lane-dense)
    BB, T, D_in = seq_ref.shape
    A = wseq_ref.shape[1]

    seq = seq_ref[...]                                             # (BB, T, D_in)

    # linear(cat(seq, exhidden)) == seq @ W_seq + hidden @ W_hid.
    # One big MXU matmul over all BB*T rows instead of BB tiny ones.
    pre_seq = jnp.dot(seq.reshape(BB * T, D_in), wseq_ref[...],
                      preferred_element_type=jnp.float32)          # (BB*T, A)
    # Hidden projection hoisted out of the per-T path: one (BB,H)@(H,A) matmul.
    pre_hid = jnp.dot(hid_ref[...], whid_ref[...],
                      preferred_element_type=jnp.float32)          # (BB, A)

    pre = pre_seq.reshape(BB, T, A) + pre_hid[:, None, :]          # (BB, T, A)
    t = jnp.tanh(pre)                                              # EUP

    # attnv: dot with a single vector -> VPU multiply + XLU lane reduce
    # (an N=1 MXU matmul would burn a full MXU pass for one output column).
    logits = jnp.sum(t * v_ref[...], axis=-1)                      # (BB, T)

    # exp mask from sequence lengths: 0 for valid steps, -1e30 for padding.
    lens = lens_ref[...]                                           # (BB, 1) int32
    tpos = jax.lax.broadcasted_iota(jnp.int32, (BB, T), 1)
    exp_mask = jnp.where(tpos < lens, 0.0, NEG_INF).astype(jnp.float32)
    masked = logits + exp_mask                                     # (BB, T)

    # softmax over the time axis (dim=-2 in the torch code; T is the last axis here).
    m = jnp.max(masked, axis=-1, keepdims=True)
    e = jnp.exp(masked - m)
    denom = jnp.sum(e, axis=-1, keepdims=True)
    scores = e * pl.reciprocal(denom, approx=True)                 # (BB, T)

    # context = scores^T @ seq == sum_t scores[b, t] * seq[b, t, :]
    # Elementwise multiply + sublane reduce is the right form for small T;
    # for T >= 128 a batched (1,T)@(T,D_in) MXU einsum would be preferable.
    ctx = jnp.sum(scores[:, :, None] * seq, axis=1)                # (BB, D_in)

    ctx_ref[...] = ctx.astype(ctx_ref.dtype)
    logits_ref[...] = masked.astype(logits_ref.dtype)


@functools.partial(jax.jit, static_argnames=("block_b",))
def learned_attention(seq, hidden, lengths, w_linear, w_attnv, block_b=None):
    """seq: (B,T,D_in) f32; hidden: (B,H) f32; lengths: (B,) int32;
       w_linear: (A, D_in+H) (PyTorch layout); w_attnv: (1, A) (PyTorch layout)."""
    B, T, D_in = seq.shape
    H = hidden.shape[1]
    A = w_linear.shape[0]

    if block_b is None:
        # Target ~256 matmul rows (BB*T) per grid step to fill MXU rows and
        # amortize the ~0.35us per-step pipeline overhead; keep the second-minor
        # dim of 2-D blocks layout friendly (multiple of 8, or == B).
        bb = max(1, 256 // max(T, 1))
        block_b = B if (bb >= B or B <= 8) else max(8, bb - (bb % 8))
    block_b = int(block_b)

    w_t = w_linear.T                          # (D_in + H, A)
    w_seq = w_t[:D_in]                        # (D_in, A)
    w_hid = w_t[D_in:]                        # (H, A)
    v_row = w_attnv.reshape(1, A)             # (1, A) -- kept as a row for the VPU dot
    lens2d = lengths.reshape(B, 1).astype(jnp.int32)

    grid_spec = pltpu.PrefetchScalarGridSpec(
        num_scalar_prefetch=0,
        grid=(pl.cdiv(B, block_b),),
        in_specs=[
            pl.BlockSpec((block_b, T, D_in), lambda i: (i, 0, 0)),   # seq tile
            pl.BlockSpec((block_b, H),       lambda i: (i, 0)),      # hidden tile
            pl.BlockSpec((block_b, 1),       lambda i: (i, 0)),      # lengths tile
            pl.BlockSpec((D_in, A),          lambda i: (0, 0)),      # W_seq (shared)
            pl.BlockSpec((H, A),             lambda i: (0, 0)),      # W_hid (shared)
            pl.BlockSpec((1, A),             lambda i: (0, 0)),      # attnv row (shared)
        ],
        out_specs=[
            pl.BlockSpec((block_b, D_in),    lambda i: (i, 0)),      # context
            pl.BlockSpec((block_b, T),       lambda i: (i, 0)),      # masked logits (lane-dense)
        ],
    )

    context, logits_bt = pl.pallas_call(
        _attention_kernel,
        grid_spec=grid_spec,
        out_shape=(
            jax.ShapeDtypeStruct((B, D_in), jnp.float32),
            jax.ShapeDtypeStruct((B, T), jnp.float32),
        ),
        compiler_params=pltpu.CompilerParams(
            dimension_semantics=("parallel",)),
    )(seq, hidden, lens2d, w_seq, w_hid, v_row)

    # Present the torch module's (B, T, 1) logits layout outside the kernel
    # (kernel stores lane-dense (B, T) to avoid masked width-1 stores).
    logits_masked = logits_bt[:, :, None]

    # use_coverage=False -> new_coverage, coverage_loss are None
    return context, logits_masked, None, None


def _reference(seq, hidden, lengths, w_linear, w_attnv):
    B, T, D_in = seq.shape
    exhid = jnp.broadcast_to(hidden[:, None, :], (B, T, hidden.shape[1]))
    copy_in = jnp.concatenate([seq, exhid], axis=2)
    logits = jnp.tanh(copy_in @ w_linear.T) @ w_attnv.T               # (B, T, 1)
    mask = (jnp.arange(T)[None, :, None] < lengths[:, None, None])
    masked = logits + jnp.where(mask, 0.0, NEG_INF)
    scores = jax.nn.softmax(masked, axis=-2)
    ctx = jnp.squeeze(jnp.swapaxes(scores, -1, -2) @ seq, 1)
    return ctx, masked


if __name__ == "__main__":
    # Small shapes: B=2, T=8, input_dim=16, hidden_dim=32, attn_dim=128
    B, T, D_in, H, A = 2, 8, 16, 32, 128

    key = jax.random.PRNGKey(0)
    k1, k2, k3, k4 = jax.random.split(key, 4)
    seq = jax.random.normal(k1, (B, T, D_in), dtype=jnp.float32)
    hidden = jax.random.normal(k2, (B, H), dtype=jnp.float32)
    lengths = jnp.array([8, 5], dtype=jnp.int32)                      # per-batch valid lengths

    # Deterministic parameter init (PyTorch Linear weight layout: (out, in)).
    w_linear = 0.05 * jax.random.normal(k3, (A, D_in + H), dtype=jnp.float32)
    w_attnv = 0.05 * jax.random.normal(k4, (1, A), dtype=jnp.float32)

    ctx, logits_masked, new_cov, cov_loss = learned_attention(
        seq, hidden, lengths, w_linear, w_attnv)
    jax.block_until_ready((ctx, logits_masked))

    ctx_ref, logits_ref = _reference(seq, hidden, lengths, w_linear, w_attnv)
    # Logits have no approximate ops -> tight tolerance.
    assert jnp.allclose(logits_masked, logits_ref, atol=1e-5, rtol=1e-5), "logits mismatch"
    # Context goes through the EUP approximate reciprocal (softmax denominator);
    # use approx=False in the kernel to recover ~1e-5 agreement if needed.
    assert jnp.allclose(ctx, ctx_ref, atol=2e-3, rtol=2e-3), "context mismatch"

    print("KERNEL_OK")
</pallas_src>

<mosaic_0001>
module attributes {stable_mosaic.version = 11 : i64} {
  func.func @_attention_kernel(%arg0: i32, %arg1: memref<2x8x16xf32, #tpu.memory_space<vmem>>, %arg2: memref<2x32xf32, #tpu.memory_space<vmem>>, %arg3: memref<2x1xi32, #tpu.memory_space<vmem>>, %arg4: memref<16x128xf32, #tpu.memory_space<vmem>>, %arg5: memref<32x128xf32, #tpu.memory_space<vmem>>, %arg6: memref<1x128xf32, #tpu.memory_space<vmem>>, %arg7: memref<2x16xf32, #tpu.memory_space<vmem>>, %arg8: memref<2x8xf32, #tpu.memory_space<vmem>>) attributes {dimension_semantics = [#tpu.dimension_semantics<parallel>], iteration_bounds = array<i64: 1>, scalar_prefetch = 0 : i64, scratch_operands = 0 : i64, tpu.core_type = #tpu.core_type<tc>, window_params = [{transform_indices = @transform_0, window_bounds = array<i64: 2, 8, 16>}, {transform_indices = @transform_1, window_bounds = array<i64: 2, 32>}, {transform_indices = @transform_2, window_bounds = array<i64: 2, 1>}, {pipeline_mode = #tpu.pipeline_mode<synchronous>, transform_indices = @transform_3, window_bounds = array<i64: 16, 128>}, {pipeline_mode = #tpu.pipeline_mode<synchronous>, transform_indices = @transform_4, window_bounds = array<i64: 32, 128>}, {pipeline_mode = #tpu.pipeline_mode<synchronous>, transform_indices = @transform_5, window_bounds = array<i64: 1, 128>}, {transform_indices = @transform_6, window_bounds = array<i64: 2, 16>}, {transform_indices = @transform_7, window_bounds = array<i64: 2, 8>}]} {
    %c0 = arith.constant 0 : index
    %c0_0 = arith.constant 0 : index
    %c0_1 = arith.constant 0 : index
    %0 = vector.load %arg1[%c0, %c0_0, %c0_1] : memref<2x8x16xf32, #tpu.memory_space<vmem>>, vector<2x8x16xf32>
    %1 = vector.shape_cast %0 : vector<2x8x16xf32> to vector<16x16xf32>
    %c0_2 = arith.constant 0 : index
    %c0_3 = arith.constant 0 : index
    %2 = vector.load %arg4[%c0_2, %c0_3] : memref<16x128xf32, #tpu.memory_space<vmem>>, vector<16x128xf32>
    %cst = arith.constant dense<0.000000e+00> : vector<16x128xf32>
    %3 = tpu.matmul %1, %2, %cst {dimension_numbers = #tpu.dot_dimension_numbers<[1], [0], [0], [1], [0, 0, 1, 1], [], []>} : vector<16x16xf32>, vector<16x128xf32>, vector<16x128xf32> -> vector<16x128xf32>
    %c0_4 = arith.constant 0 : index
    %c0_5 = arith.constant 0 : index
    %4 = vector.load %arg2[%c0_4, %c0_5] : memref<2x32xf32, #tpu.memory_space<vmem>>, vector<2x32xf32>
    %c0_6 = arith.constant 0 : index
    %c0_7 = arith.constant 0 : index
    %5 = vector.load %arg5[%c0_6, %c0_7] : memref<32x128xf32, #tpu.memory_space<vmem>>, vector<32x128xf32>
    %cst_8 = arith.constant dense<0.000000e+00> : vector<2x128xf32>
    %6 = tpu.matmul %4, %5, %cst_8 {dimension_numbers = #tpu.dot_dimension_numbers<[1], [0], [0], [1], [0, 0, 1, 1], [], []>} : vector<2x32xf32>, vector<32x128xf32>, vector<2x128xf32> -> vector<2x128xf32>
    %7 = vector.shape_cast %3 : vector<16x128xf32> to vector<2x8x128xf32>
    %8 = vector.shape_cast %6 : vector<2x128xf32> to vector<2x1x128xf32>
    %9 = vector.broadcast %8 : vector<2x1x128xf32> to vector<2x8x128xf32>
    %10 = arith.addf %7, %9 : vector<2x8x128xf32>
    %11 = math.tanh %10 : vector<2x8x128xf32>
    %c0_9 = arith.constant 0 : index
    %c0_10 = arith.constant 0 : index
    %12 = vector.load %arg6[%c0_9, %c0_10] : memref<1x128xf32, #tpu.memory_space<vmem>>, vector<1x128xf32>
    %13 = vector.shape_cast %12 : vector<1x128xf32> to vector<1x1x128xf32>
    %14 = vector.broadcast %13 : vector<1x1x128xf32> to vector<2x8x128xf32>
    %15 = arith.mulf %11, %14 : vector<2x8x128xf32>
    %cst_11 = arith.constant dense<0.000000e+00> : vector<2x8xf32>
    %16 = vector.multi_reduction <add>, %15, %cst_11 [2] : vector<2x8x128xf32> to vector<2x8xf32>
    %c0_12 = arith.constant 0 : index
    %c0_13 = arith.constant 0 : index
    %17 = vector.load %arg3[%c0_12, %c0_13] : memref<2x1xi32, #tpu.memory_space<vmem>>, vector<2x1xi32>
    %18 = tpu.iota {dimensions = array<i32: 1>} : vector<2x8xi32>
    %19 = vector.broadcast %17 : vector<2x1xi32> to vector<2x8xi32>
    %20 = arith.cmpi slt, %18, %19 : vector<2x8xi32>
    %cst_14 = arith.constant 0.000000e+00 : f32
    %cst_15 = arith.constant -1.000000e+30 : f32
    %21 = vector.broadcast %cst_14 : f32 to vector<2x8xf32>
    %22 = vector.broadcast %cst_15 : f32 to vector<2x8xf32>
    %23 = arith.select %20, %21, %22 : vector<2x8xi1>, vector<2x8xf32>
    %24 = arith.addf %16, %23 : vector<2x8xf32>
    %cst_16 = arith.constant dense<0xFF800000> : vector<2xf32>
    %25 = vector.multi_reduction <maximumf>, %24, %cst_16 [1] : vector<2x8xf32> to vector<2xf32>
    %26 = vector.shape_cast %25 : vector<2xf32> to vector<2x1xf32>
    %27 = vector.broadcast %26 : vector<2x1xf32> to vector<2x8xf32>
    %28 = arith.subf %24, %27 : vector<2x8xf32>
    %29 = math.exp %28 : vector<2x8xf32>
    %cst_17 = arith.constant dense<0.000000e+00> : vector<2xf32>
    %30 = vector.multi_reduction <add>, %29, %cst_17 [1] : vector<2x8xf32> to vector<2xf32>
    %31 = vector.shape_cast %30 : vector<2xf32> to vector<2x1xf32>
    %32 = tpu.reciprocal %31 {approx = true} : vector<2x1xf32> -> vector<2x1xf32>
    %33 = vector.broadcast %32 : vector<2x1xf32> to vector<2x8xf32>
    %34 = arith.mulf %29, %33 : vector<2x8xf32>
    %35 = vector.shape_cast %34 : vector<2x8xf32> to vector<2x8x1xf32>
    %36 = vector.broadcast %35 : vector<2x8x1xf32> to vector<2x8x16xf32>
    %37 = arith.mulf %36, %0 : vector<2x8x16xf32>
    %cst_18 = arith.constant dense<0.000000e+00> : vector<2x16xf32>
    %38 = vector.multi_reduction <add>, %37, %cst_18 [1] : vector<2x8x16xf32> to vector<2x16xf32>
    %c0_19 = arith.constant 0 : index
    %c0_20 = arith.constant 0 : index
    %39 = vector.load %arg7[%c0_19, %c0_20] : memref<2x16xf32, #tpu.memory_space<vmem>>, vector<2x16xf32>
    tpu.vector_store %arg7[%c0_19, %c0_20], %38 {strides = array<i32>} : memref<2x16xf32, #tpu.memory_space<vmem>>, vector<2x16xf32>,
    %c0_21 = arith.constant 0 : index
    %c0_22 = arith.constant 0 : index
    %40 = vector.load %arg8[%c0_21, %c0_22] : memref<2x8xf32, #tpu.memory_space<vmem>>, vector<2x8xf32>
    tpu.vector_store %arg8[%c0_21, %c0_22], %24 {strides = array<i32>} : memref<2x8xf32, #tpu.memory_space<vmem>>, vector<2x8xf32>,
    return
  }
  func.func @transform_0(%arg0: i32) -> (i32, i32, i32) {
    %c0_i32 = arith.constant 0 : i32
    %c0_i32_0 = arith.constant 0 : i32
    %c0_i32_1 = arith.constant 0 : i32
    return %arg0, %c0_i32, %c0_i32_0 : i32, i32, i32
  }
  func.func @transform_1(%arg0: i32) -> (i32, i32) {
    %c0_i32 = arith.constant 0 : i32
    %c0_i32_0 = arith.constant 0 : i32
    return %arg0, %c0_i32 : i32, i32
  }
  func.func @transform_2(%arg0: i32) -> (i32, i32) {
    %c0_i32 = arith.constant 0 : i32
    %c0_i32_0 = arith.constant 0 : i32
    return %arg0, %c0_i32 : i32, i32
  }
  func.func @transform_3(%arg0: i32) -> (i32, i32) {
    %c0_i32 = arith.constant 0 : i32
    %c0_i32_0 = arith.constant 0 : i32
    %c0_i32_1 = arith.constant 0 : i32
    return %c0_i32, %c0_i32_0 : i32, i32
  }
  func.func @transform_4(%arg0: i32) -> (i32, i32) {
    %c0_i32 = arith.constant 0 : i32
    %c0_i32_0 = arith.constant 0 : i32
    %c0_i32_1 = arith.constant 0 : i32
    return %c0_i32, %c0_i32_0 : i32, i32
  }
  func.func @transform_5(%arg0: i32) -> (i32, i32) {
    %c0_i32 = arith.constant 0 : i32
    %c0_i32_0 = arith.constant 0 : i32
    %c0_i32_1 = arith.constant 0 : i32
    return %c0_i32, %c0_i32_0 : i32, i32
  }
  func.func @transform_6(%arg0: i32) -> (i32, i32) {
    %c0_i32 = arith.constant 0 : i32
    %c0_i32_0 = arith.constant 0 : i32
    return %arg0, %c0_i32 : i32, i32
  }
  func.func @transform_7(%arg0: i32) -> (i32, i32) {
    %c0_i32 = arith.constant 0 : i32
    %c0_i32_0 = arith.constant 0 : i32
    return %arg0, %c0_i32 : i32, i32
  }
}

</mosaic_0001>

<llo_original>
// kernel: learned_attention.1
$region0: #{learned_attention.1}
  #allocation0 [shape = 'u32[]', space=smem, size = 0x4, offset = 0x4, fixed_abs, tag = 'smem constant byte address 0x4 - core index']
  #allocation1 [shape = 'u32[144,128]{1,0:T(1,128)}', space=vmem, size = 0x12000, scoped, tag = 'internal scratch']
  %s0 = inlined_call_operand.vmem [shape: f32[2,8,16], index: 0, kind: input, shape index: {}]
  %s1 = inlined_call_operand.vmem [shape: f32[2,32], index: 1, kind: input, shape index: {}]
  %s2 = inlined_call_operand.vmem [shape: s32[2,1], index: 2, kind: input, shape index: {}]
  %s3 = inlined_call_operand.vmem [shape: f32[16,128], index: 3, kind: input, shape index: {}]
  %s4 = inlined_call_operand.vmem [shape: f32[32,128], index: 4, kind: input, shape index: {}]
  %s5 = inlined_call_operand.vmem [shape: f32[1,128], index: 5, kind: input, shape index: {}]
  %s6 = inlined_call_operand.hbm [shape: f32[2,16], index: 6, kind: output, shape index: {0}]
  %s7 = inlined_call_operand.hbm [shape: f32[2,8], index: 7, kind: output, shape index: {1}]
  %8 = xla_tuple %s6, %s7
  %s9 = sld [smem:[#allocation0]]
  $region42: #{learned_attention.1} parent=0
    _
  %s11 = ssub.s32 1, %s9
  %s12 = scalar_select 0, %s11, %s9
  $region1: #{learned_attention.1} parent=0
    #allocation2 [shape = 'u8[1024]{0}', space=vmem, size = 0x400, scoped, tag = 'output window, operand 0, single buffered']
    #allocation3 [shape = 's32[1]{0}', space=sflag, size = 0x4, scoped, tag = 'scoped memory for learned_attention.1']
    #allocation4 [shape = 'u8[1024]{0}', space=vmem, size = 0x400, scoped, tag = 'output window, operand 1, single buffered']
    #allocation5 [shape = 's32[1]{0}', space=sflag, size = 0x4, scoped, tag = 'scoped memory for learned_attention.1']
    %13 = vsyncpa [#allocation3], 0
    %14 = vsyncpa [#allocation5], 0
    // Predicated region
    $region2: #{learned_attention.1} parent=1 // pred_check
      _
    $region3: #{learned_attention.1} parent=1 // pred_check_branch
      %16 = sbr.rel (0) target = $region5
    $region4: #{learned_attention.1} parent=1 // pred_region
      _
    $region5: #{learned_attention.1} parent=1 // pred_fallthru
      _
    // Predicated region
    $region6: #{learned_attention.1} parent=1 // pred_check
      _
    $region7: #{learned_attention.1} parent=1 // pred_check_branch
      %18 = sbr.rel (0) target = $region9
    $region8: #{learned_attention.1} parent=1 // pred_region
      _
    $region9: #{learned_attention.1} parent=1 // pred_fallthru
      _
    // Predicated region
    $region10: #{learned_attention.1} parent=1 // pred_check
      _
    $region11: #{learned_attention.1} parent=1 // pred_check_branch
      %20 = sbr.rel (0) target = $region13
    $region12: #{learned_attention.1} parent=1 // pred_region
      _
    $region13: #{learned_attention.1} parent=1 // pred_fallthru
      _
    // Predicated region
    $region14: #{learned_attention.1} parent=1 // pred_check
      _
    $region15: #{learned_attention.1} parent=1 // pred_check_branch
      %22 = sbr.rel (0) target = $region17
    $region16: #{learned_attention.1} parent=1 // pred_region
      _
    $region17: #{learned_attention.1} parent=1 // pred_fallthru
      _
    // Predicated region
    $region18: #{learned_attention.1} parent=1 // pred_check
      _
    $region19: #{learned_attention.1} parent=1 // pred_check_branch
      %24 = sbr.rel (0) target = $region21
    $region20: #{learned_attention.1} parent=1 // pred_region
      _
    $region21: #{learned_attention.1} parent=1 // pred_fallthru
      _
    // Predicated region
    $region22: #{learned_attention.1} parent=1 // pred_check
      _
    $region23: #{learned_attention.1} parent=1 // pred_check_branch
      %26 = sbr.rel (0) target = $region25
    $region24: #{learned_attention.1} parent=1 // pred_region
      _
    $region25: #{learned_attention.1} parent=1 // pred_fallthru
      _
    %v27 = vld [vmem:[%s0] sm:$0xff]
    %v28 = vld [vmem:[%s0 + $0x8] sm:$0xff]
    %v29 = vld [vmem:[%s3] sm:$0xff]
    %v30 = vld [vmem:[%s3 + $0x8] sm:$0xff]
    %vm31 = vcmask 130048
    %v33 = vsel %vm31, %v27, 0
    %v36 = vsel %vm31, %v28, 0
    %38 = vmatprep.subr.mxu0 0.0
    %39 = vmatpush1.msra.mxu0 0.0
    %40 = vmatprep.subr.mxu0 0.0
    %41 = vmatpush1.msra.mxu0 0.0
    %42 = vmatprep.subr.mxu0 0.0
    %43 = vmatpush1.msra.mxu0 0.0
    %44 = vmatprep.subr.mxu0 0.0
    %45 = vmatpush1.msra.mxu0 0.0
    %46 = vmatprep.subr.mxu0 0.0
    %47 = vmatpush1.msra.mxu0 0.0
    %48 = vmatprep.subr.mxu0 0.0
    %49 = vmatpush1.msra.mxu0 0.0
    %50 = vmatprep.subr.mxu0 0.0
    %51 = vmatpush1.msra.mxu0 0.0
    %52 = vmatprep.subr.mxu0 0.0
    %53 = vmatpush1.msra.mxu0 0.0
    %54 = vmatprep.subr.mxu0 0.0
    %55 = vmatpush1.msra.mxu0 0.0
    %56 = vmatprep.subr.mxu0 0.0
    %57 = vmatpush1.msra.mxu0 0.0
    %58 = vmatprep.subr.mxu0 0.0
    %59 = vmatpush1.msra.mxu0 0.0
    %60 = vmatprep.subr.mxu0 0.0
    %61 = vmatpush1.msra.mxu0 0.0
    %62 = vmatprep.subr.mxu0 0.0
    %63 = vmatpush1.msra.mxu0 0.0
    %64 = vmatprep.subr.mxu0 0.0
    %65 = vmatpush1.msra.mxu0 0.0
    %66 = vmatprep.subr.mxu0 0.0
    %67 = vmatpush1.msra.mxu0 %v30
    %68 = vmatprep.subr.mxu0 0.0
    %69 = vmatpush1.msra.mxu0 %v29
    %70 = vmatprep.subr.mxu0 0.0
    %71 = vmatpush2.msra.mxu0 0.0
    %72 = vmatprep.subr.mxu0 0.0
    %73 = vmatpush2.msra.mxu0 0.0
    %74 = vmatprep.subr.mxu0 0.0
    %75 = vmatpush2.msra.mxu0 0.0
    %76 = vmatprep.subr.mxu0 0.0
    %77 = vmatpush2.msra.mxu0 0.0
    %78 = vmatprep.subr.mxu0 0.0
    %79 = vmatpush2.msra.mxu0 0.0
    %80 = vmatprep.subr.mxu0 0.0
    %81 = vmatpush2.msra.mxu0 0.0
    %82 = vmatprep.subr.mxu0 0.0
    %83 = vmatpush2.msra.mxu0 0.0
    %84 = vmatprep.subr.mxu0 0.0
    %85 = vmatpush2.msra.mxu0 0.0
    %86 = vmatprep.subr.mxu0 0.0
    %87 = vmatpush2.msra.mxu0 0.0
    %88 = vmatprep.subr.mxu0 0.0
    %89 = vmatpush2.msra.mxu0 0.0
    %90 = vmatprep.subr.mxu0 0.0
    %91 = vmatpush2.msra.mxu0 0.0
    %92 = vmatprep.subr.mxu0 0.0
    %93 = vmatpush2.msra.mxu0 0.0
    %94 = vmatprep.subr.mxu0 0.0
    %95 = vmatpush2.msra.mxu0 0.0
    %96 = vmatprep.subr.mxu0 0.0
    %97 = vmatpush2.msra.mxu0 0.0
    %98 = vmatprep.subr.mxu0 0.0
    %99 = vmatpush2.msra.mxu0 0.0
    %100 = vmatprep.subr.mxu0 0.0
    %101 = vmatpush2.msra.mxu0 0.0
    %102 = vmatprep.mubr.f32.mxu0 0.0
    %103 = vmatmul.mubr.f32.gmra.mxu0 %v33
    %v104 = vpop.f32.mrf.mxu0
    %v105 = vadd.f32 0.0, %v104
    %v106 = vpop.f32.mrf.mxu0
    %107 = vmatprep.mubr.f32.mxu0 0.0
    %108 = vmatmul.mubr.f32.gmra.mxu0 %v36
    %v109 = vpop.f32.mrf.mxu0
    %v110 = vadd.f32 0.0, %v109
    %v111 = vpop.f32.mrf.mxu0
    %112 = vdwg.mxu0
    %v113 = vld [vmem:[%s1] sm:$0x3]
    %v114 = vld [vmem:[%s4] sm:$0xff]
    %v115 = vld [vmem:[%s4 + $0x8] sm:$0xff]
    %v116 = vld [vmem:[%s4 + $0x10] sm:$0xff]
    %v117 = vld [vmem:[%s4 + $0x18] sm:$0xff]
    %vm118 = vcmask 261120
    %v120 = vsel %vm118, %v113, 0
    %122 = vmatprep.subr.mxu0 0.0
    %123 = vmatpush1.msra.mxu0 0.0
    %124 = vmatprep.subr.mxu0 0.0
    %125 = vmatpush1.msra.mxu0 0.0
    %126 = vmatprep.subr.mxu0 0.0
    %127 = vmatpush1.msra.mxu0 0.0
    %128 = vmatprep.subr.mxu0 0.0
    %129 = vmatpush1.msra.mxu0 0.0
    %130 = vmatprep.subr.mxu0 0.0
    %131 = vmatpush1.msra.mxu0 0.0
    %132 = vmatprep.subr.mxu0 0.0
    %133 = vmatpush1.msra.mxu0 0.0
    %134 = vmatprep.subr.mxu0 0.0
    %135 = vmatpush1.msra.mxu0 0.0
    %136 = vmatprep.subr.mxu0 0.0
    %137 = vmatpush1.msra.mxu0 0.0
    %138 = vmatprep.subr.mxu0 0.0
    %139 = vmatpush1.msra.mxu0 0.0
    %140 = vmatprep.subr.mxu0 0.0
    %141 = vmatpush1.msra.mxu0 0.0
    %142 = vmatprep.subr.mxu0 0.0
    %143 = vmatpush1.msra.mxu0 0.0
    %144 = vmatprep.subr.mxu0 0.0
    %145 = vmatpush1.msra.mxu0 0.0
    %146 = vmatprep.subr.mxu0 0.0
    %147 = vmatpush1.msra.mxu0 %v117
    %148 = vmatprep.subr.mxu0 0.0
    %149 = vmatpush1.msra.mxu0 %v116
    %150 = vmatprep.subr.mxu0 0.0
    %151 = vmatpush1.msra.mxu0 %v115
    %152 = vmatprep.subr.mxu0 0.0
    %153 = vmatpush1.msra.mxu0 %v114
    %154 = vmatprep.subr.mxu0 0.0
    %155 = vmatpush2.msra.mxu0 0.0
    %156 = vmatprep.subr.mxu0 0.0
    %157 = vmatpush2.msra.mxu0 0.0
    %158 = vmatprep.subr.mxu0 0.0
    %159 = vmatpush2.msra.mxu0 0.0
    %160 = vmatprep.subr.mxu0 0.0
    %161 = vmatpush2.msra.mxu0 0.0
    %162 = vmatprep.subr.mxu0 0.0
    %163 = vmatpush2.msra.mxu0 0.0
    %164 = vmatprep.subr.mxu0 0.0
    %165 = vmatpush2.msra.mxu0 0.0
    %166 = vmatprep.subr.mxu0 0.0
    %167 = vmatpush2.msra.mxu0 0.0
    %168 = vmatprep.subr.mxu0 0.0
    %169 = vmatpush2.msra.mxu0 0.0
    %170 = vmatprep.subr.mxu0 0.0
    %171 = vmatpush2.msra.mxu0 0.0
    %172 = vmatprep.subr.mxu0 0.0
    %173 = vmatpush2.msra.mxu0 0.0
    %174 = vmatprep.subr.mxu0 0.0
    %175 = vmatpush2.msra.mxu0 0.0
    %176 = vmatprep.subr.mxu0 0.0
    %177 = vmatpush2.msra.mxu0 0.0
    %178 = vmatprep.subr.mxu0 0.0
    %179 = vmatpush2.msra.mxu0 0.0
    %180 = vmatprep.subr.mxu0 0.0
    %181 = vmatpush2.msra.mxu0 0.0
    %182 = vmatprep.subr.mxu0 0.0
    %183 = vmatpush2.msra.mxu0 0.0
    %184 = vmatprep.subr.mxu0 0.0
    %185 = vmatpush2.msra.mxu0 0.0
    %186 = vmatprep.mubr.f32.mxu0 0.0
    %187 = vmatmul.mubr.f32.gmra.mxu0 %v120
    %v188 = vpop.f32.mrf.mxu0
    %v189 = vadd.f32 0.0, %v188
    %v190 = vpop.f32.mrf.mxu0
    %191 = vdwg.mxu0
    %v194 = vunpack.c.l.s4 1966171168
    %v195 = vunpack.c.0.s8 %v194
    %v196 = vlaneseq
    %v197 = vshrl.u32 %v196, 7
    %v198 = vsub.s32 %v195, %v197
    %v199 = vrot.slane %v189, %v198
    %v200 = vcombine.high %v199, %v199
    %v202 = vunpack.c.l.s4 1966171168
    %v203 = vunpack.c.0.s8 %v202
    %v204 = vlaneseq
    %v205 = vshrl.u32 %v204, 7
    %v206 = vsub.s32 %v203, %v205
    %v207 = vrot.slane %v199, %v206
    %v209 = vunpack.c.l.s4 1966171168
    %v210 = vunpack.c.0.s8 %v209
    %v211 = vlaneseq
    %v212 = vshrl.u32 %v211, 7
    %v213 = vsub.s32 %v210, %v212
    %v214 = vrot.slane %v200, %v213
    %v215 = vlaneseq
    %v216 = vshrl.u32 %v215, 7
    %v217 = vsub.s32 0, %v216
    %v218 = vrot.slane %v207, %v217
    %v219 = vlaneseq
    %v220 = vshrl.u32 %v219, 7
    %v221 = vsub.s32 0, %v220
    %v222 = vrot.slane %v214, %v221
    %v225 = vadd.f32 %v105, %v218
    %v226 = vadd.f32 %v110, %v222
    %v227 = vtanh.pop %v225
    %v228 = vtanh.pop %v226
    %v229 = vld [vmem:[%s5] sm:$0x1]
    %v231 = vlaneseq
    %v232 = vshrl.u32 %v231, 7
    %v233 = vsub.s32 0, %v232
    %v234 = vrot.slane %v229, %v233
    %v236 = vmul.f32 %v227, %v234
    %v237 = vmul.f32 %v228, %v234
    %238 = vadd.xlane.f32.xlu0 %v236
    %v239 = vpop.xlane.xlu0 %238
    %240 = vadd.xlane.f32.xlu0 %v237
    %v241 = vpop.xlane.xlu0 %240
    %v242 = vld [vmem:[%s2] sm:$0x3]
    %v243 = vlaneseq
    %v244 = vand.u32 %v243, 127
    %245 = vset.pattern.permute.xlu0 0
    %246 = vperm.xlu0 %245, %v242
    %v247 = vpop.permute.xlu0 %246
    %vm248 = vcmp.lt.s32.totalorder %v244, %v247
    %v249 = vsel %vm248, 0.0, -1e+30
    %v251 = vlaneseq
    %v252 = vshrl.u32 %v251, 7
    %v253 = vsub.s32 0, %v252
    %v254 = vrot.slane %v249, %v253
    %256 = vbcast.lane.b32.xlu0 %v254, 256
    %v257 = vpop.permute.xlu0 %256
    %v258 = vlaneseq
    %v259 = vshrl.u32 %v258, 7
    %v260 = vsub.s32 1, %v259
    %v261 = vrot.slane %v249, %v260
    %263 = vbcast.lane.b32.xlu0 %v261, 256
    %v264 = vpop.permute.xlu0 %263
    %v267 = vadd.f32 %v239, %v257
    %v268 = vadd.f32 %v241, %v264
    %271 = vset.pattern.permute.xlu0 0
    %272 = vperm.xlu0 %271, %v267
    %v273 = vpop.permute.xlu0 %272
    %274 = vset.pattern.permute.xlu0 0
    %275 = vperm.xlu0 %274, %v268
    %v276 = vpop.permute.xlu0 %275
    %v277 = vlaneseq
    %v278 = vshrl.u32 %v277, 7
    %v279 = vsub.s32 %v244, %v278
    %v280 = vrot.slane %v273, %v279
    %v281 = vlaneseq
    %v282 = vshrl.u32 %v281, 7
    %v283 = vsub.s32 %v244, %v282
    %v284 = vrot.slane %v276, %v283
    %vm285 = vcmask 1041409
    %v286 = vsel %vm285, %v284, %v280
    %vm288 = vcmask 58368
    %v289 = vsel %vm288, %v286, -inf
    %290 = vmax.xlane.f32.xlu0 %v289
    %v291 = vpop.xlane.xlu0 %290
    %v293 = vlaneseq
    %v294 = vshrl.u32 %v293, 7
    %v295 = vsub.s32 0, %v294
    %v296 = vrot.slane %v291, %v295
    %v297 = vlaneseq
    %v298 = vshrl.u32 %v297, 7
    %v299 = vsub.s32 1, %v298
    %v300 = vrot.slane %v291, %v299
    %v303 = vsub.f32 %v267, %v296
    %v304 = vsub.f32 %v268, %v300
    %v305 = vmul.f32 %v303, 1.442695
    %v306 = vpow.pop %v305
    %v307 = vmul.f32 %v304, 1.442695
    %v308 = vpow.pop %v307
    %311 = vset.pattern.permute.xlu0 0
    %312 = vperm.xlu0 %311, %v306
    %v313 = vpop.permute.xlu0 %312
    %314 = vset.pattern.permute.xlu0 0
    %315 = vperm.xlu0 %314, %v308
    %v316 = vpop.permute.xlu0 %315
    %v317 = vlaneseq
    %v318 = vshrl.u32 %v317, 7
    %v319 = vsub.s32 %v244, %v318
    %v320 = vrot.slane %v313, %v319
    %v321 = vlaneseq
    %v322 = vshrl.u32 %v321, 7
    %v323 = vsub.s32 %v244, %v322
    %v324 = vrot.slane %v316, %v323
    %v325 = vsel %vm285, %v324, %v320
    %v327 = vsel %vm288, %v325, 0.0
    %328 = vadd.xlane.f32.xlu0 %v327
    %v329 = vpop.xlane.xlu0 %328
    %v330 = vrcp.pop %v329
    %v332 = vlaneseq
    %v333 = vshrl.u32 %v332, 7
    %v334 = vsub.s32 0, %v333
    %v335 = vrot.slane %v330, %v334
    %v336 = vlaneseq
    %v337 = vshrl.u32 %v336, 7
    %v338 = vsub.s32 1, %v337
    %v339 = vrot.slane %v330, %v338
    %v342 = vmul.f32 %v306, %v335
    %v343 = vmul.f32 %v308, %v339
    %345 = vset.pattern.permute.xlu0 0
    %346 = vperm.xlu0 %345, %v342
    %v347 = vpop.permute.xlu0 %346
    %350 = vset.pattern.permute.xlu0 0
    %351 = vperm.xlu0 %350, %v343
    %v352 = vpop.permute.xlu0 %351
    %v354 = vmul.f32 %v347, %v27
    %v355 = vmul.f32 %v352, %v28
    %v356 = vsel %vm31, %v354, 0.0
    %v357 = vrot.slane %v356, 4
    %v358 = vadd.f32 %v356, %v357
    %v359 = vrot.slane %v358, 2
    %v360 = vadd.f32 %v358, %v359
    %v361 = vrot.slane %v360, 1
    %v362 = vadd.f32 %v360, %v361
    %v363 = vsel %vm31, %v355, 0.0
    %v364 = vrot.slane %v363, 4
    %v365 = vadd.f32 %v363, %v364
    %v366 = vrot.slane %v365, 2
    %v367 = vadd.f32 %v365, %v366
    %v368 = vrot.slane %v367, 1
    %v369 = vadd.f32 %v367, %v368
    %v372 = vsel %vm285, %v369, %v362
    %vm374 = vcmask 123904
    %375 = vst.msk [vmem:[#allocation2] sm:$0x3] %vm374, %v372
    %376 = vst.msk [vmem:[#allocation4] sm:$0x3] %vm288, %v286
    // Predicated region
    $region26: #{learned_attention.1} parent=1 // pred_check
      _
    $region27: #{learned_attention.1} parent=1 // pred_check_branch
      %378 = sbr.rel (0) target = $region29
    $region28: #{learned_attention.1} parent=1 // pred_region
      %s380 = ssub.s32 32, 32
      %381 = vsyncadd [#allocation3], %s380
      %s383 = sshll.u32 [#allocation2], 4
      %s384 = int_to_ptr.vmem [resolvable:$true] %s383
      %386 = dma.vmem_to_hbm [thread:$0]  %s384, 32, %s6, [#allocation3]
    $region29: #{learned_attention.1} parent=1 // pred_fallthru
      _
    // Predicated region
    $region30: #{learned_attention.1} parent=1 // pred_check
      _
    $region31: #{learned_attention.1} parent=1 // pred_check_branch
      %388 = sbr.rel (0) target = $region33
    $region32: #{learned_attention.1} parent=1 // pred_region
      %s390 = ssub.s32 32, 32
      %391 = vsyncadd [#allocation5], %s390
      %s393 = sshll.u32 [#allocation4], 4
      %s394 = int_to_ptr.vmem [resolvable:$true] %s393
      %396 = dma.vmem_to_hbm [thread:$0]  %s394, 32, %s7, [#allocation5]
    $region33: #{learned_attention.1} parent=1 // pred_fallthru
      _
    // Predicated region
    $region34: #{learned_attention.1} parent=1 // pred_check
      _
    $region35: #{learned_attention.1} parent=1 // pred_check_branch
      %398 = sbr.rel (0) target = $region37
    $region36: #{learned_attention.1} parent=1 // pred_region
      %399 = dma.done [#allocation3], 32
    $region37: #{learned_attention.1} parent=1 // pred_fallthru
      _
    // Predicated region
    $region38: #{learned_attention.1} parent=1 // pred_check
      _
    $region39: #{learned_attention.1} parent=1 // pred_check_branch
      %401 = sbr.rel (0) target = $region41
    $region40: #{learned_attention.1} parent=1 // pred_region
      %402 = dma.done [#allocation5], 32
    $region41: #{learned_attention.1} parent=1 // pred_fallthru
      _
    %403 = vsyncpa [#allocation3], 1
    %404 = vsyncpa [#allocation5], 1

</llo_original>
